<compile_context>
chip_gen: v7x
topology: tpu7x:2x2x1
jax: 0.10.0
libtpu: 0.0.40
codegen_flags: <defaults>
</compile_context>

<pallas_src>
import functools

import jax
import jax.numpy as jnp
from jax.experimental import pallas as pl
from jax.experimental.pallas import tpu as pltpu


def _packed_kernel(x_ref, o_ref, *, num_channels):
    # x_ref: (bt, br, 128) int32 -- each word packs 4 uint8 channels of one pixel,
    #        channel 0 in the least-significant byte (little-endian bitcast).
    # o_ref: (bt, C, br, 128) float32 (lane-dense: full-width unmasked stores).
    x = x_ref[...]
    scale = jnp.float32(1.0 / 255.0)
    for c in range(num_channels):
        # VPU-only channel split: arithmetic shift + mask (the mask also strips the
        # sign extension of channel 3 when that byte is >= 128).  This is ~4 VALU
        # cycles per input vreg vs ~11+ cycles of HBM time -> fully hidden under DMA.
        ch = (x >> (8 * c)) & 0xFF
        o_ref[:, c, :, :] = ch.astype(jnp.float32) * scale


def _round_up(x, m):
    return ((x + m - 1) // m) * m


def _largest_divisor_leq(n, cap):
    cap = max(1, min(cap, n))
    for d in range(cap, 0, -1):
        if n % d == 0:
            return d
    return 1


def _vmem_budget_and_limit(user_budget=None):
    """Per-generation VMEM sizing: 64 MiB physical on v7x, 128 MiB on v5e/v6e."""
    try:
        cap = int(pltpu.get_tpu_info().vmem_capacity_bytes)
    except Exception:  # conservative (v7x-sized) fallback if the query is unavailable
        cap = 64 << 20
    limit = min((cap * 3) // 4, 100 << 20)   # headroom for Mosaic internal scratch
    budget = (limit * 3) // 4                # what our double-buffered tiles may consume
    if user_budget is not None:
        budget = max(1 << 20, min(int(user_budget), budget))  # never exceed the limit
    return budget, limit


def _pick_tiles(n, r0, c_out, vmem_budget_bytes):
    """Choose (crops/block, padded N, rows/block, padded rows).

    Tiles are sized by bytes (target ~4 MiB of output per grid step), bounded by the
    double-buffered VMEM budget, with >= 2 total grid steps kept for megacore/pipelining.
    """
    row_in = 128 * 4                   # one 128-pixel row of packed int32 input
    row_out = c_out * 128 * 4          # matching float32 output rows (C channels)
    row_db = 2 * (row_in + row_out)    # double-buffered footprint per (crop, row)

    target_out = 4 << 20               # ~4 MiB output per step: >=85% of HBM roofline
    min_out = 1 << 20                  # don't shrink below ~1 MiB just to hit a divisor

    # --- rows per block (spatial axis) ---
    cap_rows = max(1, min(vmem_budget_bytes // row_db, max(1, target_out // row_out)))
    if cap_rows >= r0:
        br, r_pad = r0, r0             # full spatial extent; block dim == array dim is legal
    else:
        cap8 = max(8, (cap_rows // 8) * 8)
        br = None
        for cand in range(cap8, 7, -8):        # prefer an exact divisor (no spatial padding)
            if r0 % cand == 0:
                br = cand
                break
        if br is None or 2 * br < cap8:        # divisor too small -> pad rows instead
            br = cap8
        r_pad = _round_up(r0, br)

    # --- crops per block (batch axis) ---
    blk_in = br * row_in
    blk_out = br * row_out
    cap_bt = max(1, min(vmem_budget_bytes // (2 * (blk_in + blk_out)),
                        max(1, target_out // blk_out)))
    cap_bt = min(cap_bt, n)
    bt = _largest_divisor_leq(n, cap_bt)       # prefer an exact divisor (no batch padding)
    if bt < cap_bt and bt * blk_out < min_out:
        bt = cap_bt                            # tiny divisor (e.g. prime N) -> pad the batch
    n_pad = _round_up(n, bt)

    # --- keep >= 2 grid steps so megacore / the pipeline has work to split ---
    if (n_pad // bt) * (r_pad // br) < 2:
        if n >= 2:
            bt = pl.cdiv(n, 2)
            n_pad = _round_up(n, bt)
        elif r0 > 8:
            br = _round_up(pl.cdiv(r0, 2), 8)
            r_pad = _round_up(r0, br)
        # else: a single tiny block; nothing worth splitting.
    return bt, n_pad, br, r_pad


def stack2tensor(crops: jax.Array, *, vmem_budget_bytes: int | None = None) -> jax.Array:
    """crops: (N, H, W, C) uint8  ->  (N, C, H, W) float32 in [0, 1] (ToTensor + stack)."""
    if crops.dtype != jnp.uint8:
        raise ValueError("stack2tensor expects uint8 crops (PIL-style HWC)")
    N, H, W, C = crops.shape
    if C > 4:
        # TODO(synk): generic C would need a strided/transpose path; images are C <= 4.
        raise NotImplementedError("stack2tensor supports C <= 4 channels")
    HW = H * W

    budget, limit = _vmem_budget_and_limit(vmem_budget_bytes)
    bt, n_pad, br, r_pad = _pick_tiles(N, pl.cdiv(HW, 128), C, budget)
    hw_pad = r_pad * 128

    # Pack the (up to) 4 uint8 channels of each pixel into one little-endian 32-bit word
    # (channel 0 in the LSB).  allow_input_fusion=[True] below lets XLA fold this pack
    # into the kernel's input DMA instead of materializing an extra HBM pass; ideally the
    # producer supplies pre-packed int32 pixels and this is a pure metadata view.
    x = crops
    if C < 4:
        x = jnp.pad(x, ((0, 0), (0, 0), (0, 0), (0, 4 - C)))  # pad channel is never emitted
    packed = jax.lax.bitcast_convert_type(x.reshape(N, HW, 4), jnp.int32)  # (N, HW)
    if n_pad != N or hw_pad != HW:
        packed = jnp.pad(packed, ((0, n_pad - N), (0, hw_pad - HW)))
    packed = packed.reshape(n_pad, r_pad, 128)

    out_flat = pl.pallas_call(
        functools.partial(_packed_kernel, num_channels=C),
        out_shape=jax.ShapeDtypeStruct((n_pad, C, r_pad, 128), jnp.float32),
        grid_spec=pltpu.PrefetchScalarGridSpec(
            num_scalar_prefetch=0,
            grid=(n_pad // bt, r_pad // br),
            # TODO(synk): add pipeline_mode=pl.Buffered(3) on the input spec only if
            # xprof shows exposed input DMA gaps (cheap: input tile is 1/C of output).
            in_specs=[pl.BlockSpec((bt, br, 128), lambda i, j: (i, j, 0))],
            out_specs=pl.BlockSpec((bt, C, br, 128), lambda i, j: (i, 0, j, 0)),
        ),
        compiler_params=pltpu.CompilerParams(
            dimension_semantics=("parallel", "parallel"),  # both axes split across TCs
            vmem_limit_bytes=limit,                        # per-generation (v7x vs v5e/v6e)
            allow_input_fusion=[True],                     # fold the pack into the input read
        ),
    )(packed)

    # Metadata reshape back to the PyTorch NCHW layout, outside the kernel.
    out = out_flat.reshape(n_pad, C, hw_pad)
    if n_pad != N or hw_pad != HW:
        out = out[:N, :, :HW]
    return out.reshape(N, C, H, W)


if __name__ == "__main__":
    key = jax.random.PRNGKey(0)
    k1, k2 = jax.random.split(key)

    # 4-channel crops (RGBA / pre-padded RGB): N=2 crops of 16x16.
    crops4 = jax.random.randint(k1, (2, 16, 16, 4), 0, 256, dtype=jnp.int32).astype(jnp.uint8)
    out4 = jax.block_until_ready(stack2tensor(crops4))
    ref4 = jnp.transpose(crops4.astype(jnp.float32) / 255.0, (0, 3, 1, 2))
    assert out4.shape == (2, 4, 16, 16), f"bad shape {out4.shape}"
    assert out4.dtype == jnp.float32, f"bad dtype {out4.dtype}"
    assert bool(jnp.allclose(out4, ref4, atol=1e-6)), "mismatch vs reference (C=4)"

    # Raw 3-channel (RGB) crops now also take the packed path (padded to 4 channels),
    # with an odd N exercising the batch-padding logic.
    crops3 = jax.random.randint(k2, (3, 16, 16, 3), 0, 256, dtype=jnp.int32).astype(jnp.uint8)
    out3 = jax.block_until_ready(stack2tensor(crops3))
    ref3 = jnp.transpose(crops3.astype(jnp.float32) / 255.0, (0, 3, 1, 2))
    assert out3.shape == (3, 3, 16, 16), f"bad shape {out3.shape}"
    assert out3.dtype == jnp.float32, f"bad dtype {out3.dtype}"
    assert bool(jnp.allclose(out3, ref3, atol=1e-6)), "mismatch vs reference (C=3)"

    print("KERNEL_OK")
</pallas_src>

<mosaic_0001>
module attributes {stable_mosaic.version = 11 : i64} {
  func.func @_packed_kernel(%arg0: i32, %arg1: i32, %arg2: memref<1x2x128xi32, #tpu.memory_space<vmem>>, %arg3: memref<1x4x2x128xf32, #tpu.memory_space<vmem>>) attributes {dimension_semantics = [#tpu.dimension_semantics<parallel>, #tpu.dimension_semantics<parallel>], iteration_bounds = array<i64: 2, 1>, scalar_prefetch = 0 : i64, scratch_operands = 0 : i64, tpu.core_type = #tpu.core_type<tc>, window_params = [{transform_indices = @transform_0, window_bounds = array<i64: 1, 2, 128>}, {transform_indices = @transform_1, window_bounds = array<i64: 1, 4, 2, 128>}]} {
    %c0 = arith.constant 0 : index
    %c0_0 = arith.constant 0 : index
    %c0_1 = arith.constant 0 : index
    %0 = vector.load %arg2[%c0, %c0_0, %c0_1] : memref<1x2x128xi32, #tpu.memory_space<vmem>>, vector<1x2x128xi32>
    %c0_i32 = arith.constant 0 : i32
    %1 = vector.broadcast %c0_i32 : i32 to vector<1x2x128xi32>
    %2 = arith.shrsi %0, %1 : vector<1x2x128xi32>
    %c255_i32 = arith.constant 255 : i32
    %3 = vector.broadcast %c255_i32 : i32 to vector<1x2x128xi32>
    %4 = arith.andi %2, %3 : vector<1x2x128xi32>
    %5 = arith.sitofp %4 : vector<1x2x128xi32> to vector<1x2x128xf32>
    %cst = arith.constant 0.00392156886 : f32
    %6 = vector.broadcast %cst : f32 to vector<1x2x128xf32>
    %7 = arith.mulf %5, %6 : vector<1x2x128xf32>
    %c0_2 = arith.constant 0 : index
    %c0_3 = arith.constant 0 : index
    %c0_4 = arith.constant 0 : index
    %c0_5 = arith.constant 0 : index
    %8 = vector.load %arg3[%c0_2, %c0_3, %c0_4, %c0_5] : memref<1x4x2x128xf32, #tpu.memory_space<vmem>>, vector<1x1x2x128xf32>
    %9 = vector.shape_cast %8 : vector<1x1x2x128xf32> to vector<1x2x128xf32>
    %10 = vector.shape_cast %7 : vector<1x2x128xf32> to vector<1x1x2x128xf32>
    tpu.vector_store %arg3[%c0_2, %c0_3, %c0_4, %c0_5], %10 {strides = array<i32>} : memref<1x4x2x128xf32, #tpu.memory_space<vmem>>, vector<1x1x2x128xf32>,
    %c8_i32 = arith.constant 8 : i32
    %11 = vector.broadcast %c8_i32 : i32 to vector<1x2x128xi32>
    %12 = arith.shrsi %0, %11 : vector<1x2x128xi32>
    %c255_i32_6 = arith.constant 255 : i32
    %13 = vector.broadcast %c255_i32_6 : i32 to vector<1x2x128xi32>
    %14 = arith.andi %12, %13 : vector<1x2x128xi32>
    %15 = arith.sitofp %14 : vector<1x2x128xi32> to vector<1x2x128xf32>
    %cst_7 = arith.constant 0.00392156886 : f32
    %16 = vector.broadcast %cst_7 : f32 to vector<1x2x128xf32>
    %17 = arith.mulf %15, %16 : vector<1x2x128xf32>
    %c0_8 = arith.constant 0 : index
    %c1 = arith.constant 1 : index
    %c0_9 = arith.constant 0 : index
    %c0_10 = arith.constant 0 : index
    %18 = vector.load %arg3[%c0_8, %c1, %c0_9, %c0_10] : memref<1x4x2x128xf32, #tpu.memory_space<vmem>>, vector<1x1x2x128xf32>
    %19 = vector.shape_cast %18 : vector<1x1x2x128xf32> to vector<1x2x128xf32>
    %20 = vector.shape_cast %17 : vector<1x2x128xf32> to vector<1x1x2x128xf32>
    tpu.vector_store %arg3[%c0_8, %c1, %c0_9, %c0_10], %20 {strides = array<i32>} : memref<1x4x2x128xf32, #tpu.memory_space<vmem>>, vector<1x1x2x128xf32>,
    %c16_i32 = arith.constant 16 : i32
    %21 = vector.broadcast %c16_i32 : i32 to vector<1x2x128xi32>
    %22 = arith.shrsi %0, %21 : vector<1x2x128xi32>
    %c255_i32_11 = arith.constant 255 : i32
    %23 = vector.broadcast %c255_i32_11 : i32 to vector<1x2x128xi32>
    %24 = arith.andi %22, %23 : vector<1x2x128xi32>
    %25 = arith.sitofp %24 : vector<1x2x128xi32> to vector<1x2x128xf32>
    %cst_12 = arith.constant 0.00392156886 : f32
    %26 = vector.broadcast %cst_12 : f32 to vector<1x2x128xf32>
    %27 = arith.mulf %25, %26 : vector<1x2x128xf32>
    %c0_13 = arith.constant 0 : index
    %c2 = arith.constant 2 : index
    %c0_14 = arith.constant 0 : index
    %c0_15 = arith.constant 0 : index
    %28 = vector.load %arg3[%c0_13, %c2, %c0_14, %c0_15] : memref<1x4x2x128xf32, #tpu.memory_space<vmem>>, vector<1x1x2x128xf32>
    %29 = vector.shape_cast %28 : vector<1x1x2x128xf32> to vector<1x2x128xf32>
    %30 = vector.shape_cast %27 : vector<1x2x128xf32> to vector<1x1x2x128xf32>
    tpu.vector_store %arg3[%c0_13, %c2, %c0_14, %c0_15], %30 {strides = array<i32>} : memref<1x4x2x128xf32, #tpu.memory_space<vmem>>, vector<1x1x2x128xf32>,
    %c24_i32 = arith.constant 24 : i32
    %31 = vector.broadcast %c24_i32 : i32 to vector<1x2x128xi32>
    %32 = arith.shrsi %0, %31 : vector<1x2x128xi32>
    %c255_i32_16 = arith.constant 255 : i32
    %33 = vector.broadcast %c255_i32_16 : i32 to vector<1x2x128xi32>
    %34 = arith.andi %32, %33 : vector<1x2x128xi32>
    %35 = arith.sitofp %34 : vector<1x2x128xi32> to vector<1x2x128xf32>
    %cst_17 = arith.constant 0.00392156886 : f32
    %36 = vector.broadcast %cst_17 : f32 to vector<1x2x128xf32>
    %37 = arith.mulf %35, %36 : vector<1x2x128xf32>
    %c0_18 = arith.constant 0 : index
    %c3 = arith.constant 3 : index
    %c0_19 = arith.constant 0 : index
    %c0_20 = arith.constant 0 : index
    %38 = vector.load %arg3[%c0_18, %c3, %c0_19, %c0_20] : memref<1x4x2x128xf32, #tpu.memory_space<vmem>>, vector<1x1x2x128xf32>
    %39 = vector.shape_cast %38 : vector<1x1x2x128xf32> to vector<1x2x128xf32>
    %40 = vector.shape_cast %37 : vector<1x2x128xf32> to vector<1x1x2x128xf32>
    tpu.vector_store %arg3[%c0_18, %c3, %c0_19, %c0_20], %40 {strides = array<i32>} : memref<1x4x2x128xf32, #tpu.memory_space<vmem>>, vector<1x1x2x128xf32>,
    return
  }
  func.func @transform_0(%arg0: i32, %arg1: i32) -> (i32, i32, i32) {
    %c0_i32 = arith.constant 0 : i32
    %c0_i32_0 = arith.constant 0 : i32
    return %arg0, %arg1, %c0_i32 : i32, i32, i32
  }
  func.func @transform_1(%arg0: i32, %arg1: i32) -> (i32, i32, i32, i32) {
    %c0_i32 = arith.constant 0 : i32
    %c0_i32_0 = arith.constant 0 : i32
    %c0_i32_1 = arith.constant 0 : i32
    return %arg0, %c0_i32, %arg1, %c0_i32_0 : i32, i32, i32, i32
  }
}

</mosaic_0001>

<llo_original>
// kernel: tpu_custom_call.1
$region0: #{tpu_custom_call.1}
  #allocation0 [shape = 'u32[]', space=smem, size = 0x4, offset = 0x4, fixed_abs, tag = 'smem constant byte address 0x4 - core index']
  #allocation1 [shape = 'u32[144,128]{1,0:T(1,128)}', space=vmem, size = 0x12000, scoped, tag = 'internal scratch']
  %s0 = inlined_call_operand.hbm [shape: s32[2,2,128], index: 0, kind: input, shape index: {}]
  %s1 = inlined_call_operand.hbm [shape: f32[2,4,2,128], index: 1, kind: output, shape index: {}]
  %s2 = sld [smem:[#allocation0]]
  $region41: #{tpu_custom_call.1} parent=0
    _
  %s4 = ssub.s32 1, %s2
  %s5 = scalar_select 0, %s4, %s2
  $region1: #{tpu_custom_call.1} parent=0
    #allocation2 [shape = 'u8[2048]{0}', space=vmem, size = 0x800, scoped, tag = 'input window, operand 0']
    #allocation3 [shape = 's32[2]{0}', space=sflag, size = 0x8, scoped, tag = 'scoped memory for tpu_custom_call.1']
    #allocation4 [shape = 's32[2]{0}', space=sflag, size = 0x8, scoped, tag = 'scoped memory for tpu_custom_call.1']
    #allocation5 [shape = 'u8[8192]{0}', space=vmem, size = 0x2000, scoped, tag = 'output window, operand 0']
    %6 = vsyncpa [#allocation3], 0
    %s7 = scalar_lea.sflag [#allocation3], 1
    %8 = vsyncpa %s7, 0
    %9 = vsyncpa [#allocation4], 0
    %s10 = scalar_lea.sflag [#allocation4], 1
    %11 = vsyncpa %s10, 0
    loop: start=0, step=1, limit=4
    $region2: #{tpu_custom_call.1} parent=1 // loop_pre_header
      _
    $region3: #{tpu_custom_call.1} parent=1 // loop_header
      %s13 = sphi 0, %s17
      %p14 = scmp.ge.s32.totalorder %s13, 4
      %s20 = sphi 0, %s32
      %s21 = sphi 0, %s28
      %s22 = sphi 0, %s20
      %s23 = sphi 0, %s21
      %s24 = sphi 0, %s22
      %s25 = sphi 0, %s23
      %s37 = sphi 0, %s39
      %s40 = sphi 0, %s37
      %s41 = sphi 0, %s40
      %s57 = sphi 0, %s41
      %s65 = sphi 0, %s67
      %s68 = sphi 0, %s65
      %s69 = sphi 0, %s68
      %s85 = sphi 0, %s69
    $region4: #{tpu_custom_call.1} parent=1 // loop_header_branch
      %16 = sbr.rel (%p14) target = $region8
    $region5: #{tpu_custom_call.1} parent=1 // loop_body
      %s18 = ssub.s32 %s13, 1
      %s19 = ssub.s32 %s13, 2
      %s26 = sadd.s32 1, %s21
      %p27 = scmp.ge.s32.totalorder %s26, 1
      %s28 = scalar_select %p27, 0, %s26
      %s29 = sadd.s32 1, %s20
      %s30 = scalar_select %p27, %s29, %s20
      %p31 = scmp.ge.s32.totalorder %s30, 2
      %s32 = scalar_select %p31, 0, %s30
      %s33 = ssub.s32 %s20, %s32
      %s34 = ssub.s32 %s21, %s28
      %s35 = sor.u32 %s33, %s34
      %p36 = scmp.eq.s32.totalorder %s35, 0
      %s38 = sadd.s32 %s37, 1
      %s39 = scalar_select %p36, %s37, %s38
      %p42 = pneg %p36
      %p43 = scmp.eq.s32.totalorder %s13, 1
      %p44 = por %p42, %p43
      %p45 = scmp.ne.s32.totalorder %s37, %s40
      %p46 = scmp.eq.s32.totalorder %s13, 0
      %p47 = por %p45, %p46
      %p48 = scmp.ne.s32.totalorder %s37, %s40
      %p49 = scmp.eq.s32.totalorder %s18, 1
      %p50 = por %p48, %p49
      %p51 = scmp.ne.s32.totalorder %s40, %s41
      %p52 = scmp.eq.s32.totalorder %s18, 0
      %p53 = por %p51, %p52
      %p54 = scmp.ne.s32.totalorder %s40, %s41
      %p55 = scmp.eq.s32.totalorder %s19, 1
      %p56 = por %p54, %p55
      %p58 = scmp.ne.s32.totalorder %s41, %s57
      %p59 = scmp.eq.s32.totalorder %s19, 0
      %p60 = por %p58, %p59
      %s61 = ssub.s32 %s20, %s32
      %s62 = ssub.s32 %s21, %s28
      %s63 = sor.u32 %s61, %s62
      %p64 = scmp.eq.s32.totalorder %s63, 0
      %s66 = sadd.s32 %s65, 1
      %s67 = scalar_select %p64, %s65, %s66
      %p70 = pneg %p64
      %p71 = scmp.eq.s32.totalorder %s13, 1
      %p72 = por %p70, %p71
      %p73 = scmp.ne.s32.totalorder %s65, %s68
      %p74 = scmp.eq.s32.totalorder %s13, 0
      %p75 = por %p73, %p74
      %p76 = scmp.ne.s32.totalorder %s65, %s68
      %p77 = scmp.eq.s32.totalorder %s18, 1
      %p78 = por %p76, %p77
      %p79 = scmp.ne.s32.totalorder %s68, %s69
      %p80 = scmp.eq.s32.totalorder %s18, 0
      %p81 = por %p79, %p80
      %p82 = scmp.ne.s32.totalorder %s68, %s69
      %p83 = scmp.eq.s32.totalorder %s19, 1
      %p84 = por %p82, %p83
      %p86 = scmp.ne.s32.totalorder %s69, %s85
      %p87 = scmp.eq.s32.totalorder %s19, 0
      %p88 = por %p86, %p87
      %p89 = scmp.le.s32.totalorder 1, %s13
      %p90 = scmp.lt.s32.totalorder %s13, 3
      %p91 = pnand %p89, %p90
      %p92 = pneg %p91
      // Predicated region
      $region9: #{tpu_custom_call.1} parent=5 // pred_check
        _
      $region10: #{tpu_custom_call.1} parent=5 // pred_check_branch
        %94 = sbr.rel (%p91) target = $region12
      $region11: #{tpu_custom_call.1} parent=5 // pred_region
        %s95 = ssub.s32 %s13, 1
      $region12: #{tpu_custom_call.1} parent=5 // pred_fallthru
        _
      %p96 = scmp.lt.s32.totalorder %s13, 2
      // Predicated region
      $region13: #{tpu_custom_call.1} parent=5 // pred_check
        %p97 = pneg %p96
      $region14: #{tpu_custom_call.1} parent=5 // pred_check_branch
        %99 = sbr.rel (%p97) target = $region16
      $region15: #{tpu_custom_call.1} parent=5 // pred_region
        // Predicated region
        $region17: #{tpu_custom_call.1} parent=15 // pred_check
          %p100 = pneg %p47
        $region18: #{tpu_custom_call.1} parent=15 // pred_check_branch
          %102 = sbr.rel (%p100) target = $region20
        $region19: #{tpu_custom_call.1} parent=15 // pred_region
          %s103 = sand.u32 %s37, 1
          %s104 = scalar_lea.sflag [#allocation3], %s103
          %s105 = sand.u32 %s37, 1
          %s106 = smul.addr %s105, 2
          %s107 = scalar_lea.vmem [#allocation2], %s106
          %s109 = ssub.s32 32, 32
          %110 = vsyncadd %s104, %s109
          %s111 = sadd.s32 %s21, %s20
          %s112 = smul.addr %s111, 32
          %s113 = scalar_lea.hbm %s0, %s112
          %s115 = sshll.u32 %s107, 4
          %s116 = int_to_ptr.vmem [resolvable:$true] %s115
          %118 = dma.hbm_to_vmem [thread:$0]  %s113, 32, %s116, %s104
        $region20: #{tpu_custom_call.1} parent=15 // pred_fallthru
          _
      $region16: #{tpu_custom_call.1} parent=5 // pred_fallthru
        _
      %p119 = scmp.le.s32.totalorder 1, %s13
      %p120 = scmp.lt.s32.totalorder %s13, 3
      %p121 = pnand %p119, %p120
      %p122 = pneg %p121
      // Predicated region
      $region21: #{tpu_custom_call.1} parent=5 // pred_check
        _
      $region22: #{tpu_custom_call.1} parent=5 // pred_check_branch
        %124 = sbr.rel (%p121) target = $region24
      $region23: #{tpu_custom_call.1} parent=5 // pred_region
        %s125 = ssub.s32 %s13, 1
        %s126 = sand.u32 %s40, 1
        %s127 = scalar_lea.sflag [#allocation3], %s126
        %s128 = sand.u32 %s40, 1
        %s129 = smul.addr %s128, 2
        %s130 = scalar_lea.vmem [#allocation2], %s129
        // Predicated region
        $region25: #{tpu_custom_call.1} parent=23 // pred_check
          %p131 = pneg %p53
        $region26: #{tpu_custom_call.1} parent=23 // pred_check_branch
          %133 = sbr.rel (%p131) target = $region28
        $region27: #{tpu_custom_call.1} parent=23 // pred_region
          %134 = dma.done %s127, 32
        $region28: #{tpu_custom_call.1} parent=23 // pred_fallthru
          _
        %s135 = sand.u32 %s40, 1
        %s136 = scalar_lea.sflag [#allocation3], %s135
        %s137 = sand.u32 %s40, 1
        %s138 = smul.addr %s137, 2
        %s139 = scalar_lea.vmem [#allocation2], %s138
        %p140 = pneg %p53
        %p141 = pneg %p50
        %p142 = pneg %p81
        %p143 = pneg %p78
        %s144 = sand.u32 %s68, 1
        %s145 = scalar_lea.sflag [#allocation4], %s144
        %s146 = sand.u32 %s68, 1
        %s147 = smul.addr %s146, 8
        %s148 = scalar_lea.vmem [#allocation5], %s147
        %v149 = vld [vmem:[%s130] sm:$0x3]
        %v150 = vand.u32 %v149, 255
        %v151 = vcvt.s32.f32 %v150
        %v152 = vmul.f32 %v151, 0.003921569
        %153 = vst [vmem:[%s148] sm:$0x3] %v152
        %v154 = vshra.s32 %v149, 8
        %v155 = vand.u32 %v154, 255
        %v156 = vcvt.s32.f32 %v155
        %v157 = vmul.f32 %v156, 0.003921569
        %s158 = scalar_lea.vmem %s148, 2 [#allocation5]
        %159 = vst [vmem:[%s158] sm:$0x3] %v157
        %v160 = vshra.s32 %v149, 16
        %v161 = vand.u32 %v160, 255
        %v162 = vcvt.s32.f32 %v161
        %v163 = vmul.f32 %v162, 0.003921569
        %s164 = scalar_lea.vmem %s148, 4 [#allocation5]
        %165 = vst [vmem:[%s164] sm:$0x3] %v163
        %v166 = vshra.s32 %v149, 24
        %v167 = vand.u32 %v166, 255
        %v168 = vcvt.s32.f32 %v167
        %v169 = vmul.f32 %v168, 0.003921569
        %s170 = scalar_lea.vmem %s148, 6 [#allocation5]
        %171 = vst [vmem:[%s170] sm:$0x3] %v169
        %s172 = sand.u32 %s68, 1
        %s173 = scalar_lea.sflag [#allocation4], %s172
        %s174 = sand.u32 %s68, 1
        %s175 = smul.addr %s174, 8
        %s176 = scalar_lea.vmem [#allocation5], %s175
        // Predicated region
        $region29: #{tpu_custom_call.1} parent=23 // pred_check
          %p177 = pneg %p78
        $region30: #{tpu_custom_call.1} parent=23 // pred_check_branch
          %179 = sbr.rel (%p177) target = $region32
        $region31: #{tpu_custom_call.1} parent=23 // pred_region
          %s181 = ssub.s32 128, 128
          %182 = vsyncadd %s173, %s181
          %s183 = smul.addr %s22, 4
          %s184 = sadd.s32 %s23, %s183
          %s185 = smul.addr %s184, 32
          %s186 = scalar_lea.hbm %s1, %s185
          %s187 = sshll.u32 %s176, 4
          %s188 = int_to_ptr.vmem [resolvable:$true] %s187
          %193 = dma.vmem_to_hbm [thread:$0]  %s188, 128, %s186, %s173, 32, 32, 2
        $region32: #{tpu_custom_call.1} parent=23 // pred_fallthru
          _
      $region24: #{tpu_custom_call.1} parent=5 // pred_fallthru
        _
      %p194 = scmp.le.s32.totalorder 2, %s13
      // Predicated region
      $region33: #{tpu_custom_call.1} parent=5 // pred_check
        %p195 = pneg %p194
      $region34: #{tpu_custom_call.1} parent=5 // pred_check_branch
        %197 = sbr.rel (%p195) target = $region36
      $region35: #{tpu_custom_call.1} parent=5 // pred_region
        %s198 = ssub.s32 %s13, 2
        // Predicated region
        $region37: #{tpu_custom_call.1} parent=35 // pred_check
          %p199 = pneg %p84
        $region38: #{tpu_custom_call.1} parent=35 // pred_check_branch
          %201 = sbr.rel (%p199) target = $region40
        $region39: #{tpu_custom_call.1} parent=35 // pred_region
          %s202 = sand.u32 %s69, 1
          %s203 = scalar_lea.sflag [#allocation4], %s202
          %s204 = sand.u32 %s69, 1
          %s205 = smul.addr %s204, 8
          %s206 = scalar_lea.vmem [#allocation5], %s205
          %207 = dma.done %s203, 128
        $region40: #{tpu_custom_call.1} parent=35 // pred_fallthru
          _
      $region36: #{tpu_custom_call.1} parent=5 // pred_fallthru
        _
    $region6: #{tpu_custom_call.1} parent=1 // loop_footer
      %s17 = sadd.s32 1, %s13
    $region7: #{tpu_custom_call.1} parent=1 // loop_footer_branch
      %12 = sbr.rel target = $region3
    $region8: #{tpu_custom_call.1} parent=1 // loop_exit
      _
    %208 = vsyncpa [#allocation3], 1
    %s209 = scalar_lea.sflag [#allocation3], 1
    %210 = vsyncpa %s209, 1
    %211 = vsyncpa [#allocation4], 1
    %s212 = scalar_lea.sflag [#allocation4], 1
    %213 = vsyncpa %s212, 1

</llo_original>
